<compile_context>
chip_gen: v7x
topology: tpu7x:2x2x1
jax: 0.10.0
libtpu: 0.0.40
codegen_flags: <defaults>
</compile_context>

<pallas_src>
import functools

import jax
import jax.numpy as jnp
from jax.experimental import pallas as pl
from jax.experimental.pallas import tpu as pltpu


def _edn_kernel(x_ref, w_ref, b_ref, alpha_ref, s_ref):
    # e = ReLU(x @ W + b); alpha = e + 1; S = sum(alpha, -1)
    e = jnp.dot(x_ref[...], w_ref[...], preferred_element_type=jnp.float32)
    e = jnp.maximum(e + b_ref[...], 0.0)
    alpha = e + 1.0
    alpha_ref[...] = alpha.astype(alpha_ref.dtype)
    s_ref[...] = jnp.sum(alpha, axis=-1, keepdims=True)


@functools.partial(jax.jit, static_argnames=("num_classes", "tm"))
def view_specific_edn(x, w, b, *, num_classes, tm=4096):
    """x: [B, D], w: [D, C] (PyTorch Linear weight already transposed),
    b: [C].  Returns (r [B, 1], alpha [B, C]) like the PyTorch module."""
    B, D = x.shape
    C = num_classes
    assert w.shape == (D, C) and b.shape == (C,)

    sub = 8  # f32 sublane granularity
    # Batch tile: no bigger than the (rounded-up) batch itself.
    tm_eff = max(sub, min(tm, pl.cdiv(B, sub) * sub))
    # v7x megacore: prefer >= 2 grid steps so the "parallel" axis can split
    # across the 2 TensorCores (no effect on v5e/v6e correctness or perf).
    if pl.cdiv(B, tm_eff) < 2 and B > 2 * sub:
        tm_eff = pl.cdiv(pl.cdiv(B, 2), sub) * sub

    # VMEM footprint: double-buffered x/alpha/S tiles + resident W/bias.
    def _footprint(t):
        return (2 * t * D * x.dtype.itemsize      # x tiles
                + D * C * w.dtype.itemsize        # resident W
                + C * 4                           # resident bias
                + 2 * t * C * 4                   # alpha tiles
                + 2 * t * 4)                      # S tiles

    budget = 32 << 20                             # safe on v5e/v6e/v7x
    while _footprint(tm_eff) > budget and tm_eff > sub:
        tm_eff = max(sub, tm_eff // 2)            # clamp the tile, not the limit
    vmem_limit = int(min(max(2 * _footprint(tm_eff), 4 << 20), 64 << 20))

    grid = (pl.cdiv(B, tm_eff),)
    b2 = b.reshape(1, C).astype(jnp.float32)

    alpha, S = pl.pallas_call(
        _edn_kernel,
        out_shape=(jax.ShapeDtypeStruct((B, C), jnp.float32),
                   jax.ShapeDtypeStruct((B, 1), jnp.float32)),
        grid_spec=pltpu.PrefetchScalarGridSpec(
            num_scalar_prefetch=0,
            grid=grid,
            in_specs=[
                pl.BlockSpec((tm_eff, D), lambda i: (i, 0)),   # x tile
                pl.BlockSpec((D, C), lambda i: (0, 0)),        # resident W
                pl.BlockSpec((1, C), lambda i: (0, 0)),        # resident bias
            ],
            out_specs=[
                pl.BlockSpec((tm_eff, C), lambda i: (i, 0)),   # alpha tile
                pl.BlockSpec((tm_eff, 1), lambda i: (i, 0)),   # row-sum S
            ],
        ),
        compiler_params=pltpu.CompilerParams(
            dimension_semantics=("parallel",),
            vmem_limit_bytes=vmem_limit,
        ),
    )(x, w, b2)

    r = 1.0 - jnp.float32(C) / S
    return r, alpha


def _reference(x, w, b, num_classes):
    e = jnp.maximum(x @ w + b[None, :], 0.0)
    alpha = e + 1.0
    S = jnp.sum(alpha, axis=-1, keepdims=True)
    r = 1.0 - num_classes / S
    return r, alpha


if __name__ == "__main__":
    # sample_shape = (32,) -> fc_in = 32 -> fc_dims = [32, num_classes]
    B, D, C = 8, 32, 8
    key = jax.random.PRNGKey(0)
    kx, kw, kb = jax.random.split(key, 3)

    x = jax.random.normal(kx, (B, D), dtype=jnp.float32)
    # deterministic parameter init (synthetic; not loaded from checkpoint)
    bound = 1.0 / jnp.sqrt(D)
    w = jax.random.uniform(kw, (D, C), minval=-bound, maxval=bound,
                           dtype=jnp.float32)
    b = jax.random.uniform(kb, (C,), minval=-bound, maxval=bound,
                           dtype=jnp.float32)

    # --- small batch, single tile -------------------------------------------
    r, alpha = view_specific_edn(x, w, b, num_classes=C)
    jax.block_until_ready((r, alpha))
    r_ref, alpha_ref = _reference(x, w, b, C)
    assert r.shape == (B, 1) and alpha.shape == (B, C)
    assert jnp.allclose(alpha, alpha_ref, atol=1e-5, rtol=1e-5)
    assert jnp.allclose(r, r_ref, atol=1e-5, rtol=1e-5)

    # --- multi-tile batch grid with a partial last block ---------------------
    B2 = 300
    x2 = jax.random.normal(jax.random.PRNGKey(1), (B2, D), dtype=jnp.float32)
    r2, a2 = view_specific_edn(x2, w, b, num_classes=C, tm=128)
    jax.block_until_ready((r2, a2))
    r2_ref, a2_ref = _reference(x2, w, b, C)
    assert r2.shape == (B2, 1) and a2.shape == (B2, C)
    assert jnp.allclose(a2, a2_ref, atol=1e-5, rtol=1e-5)
    assert jnp.allclose(r2, r2_ref, atol=1e-5, rtol=1e-5)

    # --- large batch, default tile (amortized step overhead, >=2 grid steps) --
    B3 = 4096 + 300
    x3 = jax.random.normal(jax.random.PRNGKey(2), (B3, D), dtype=jnp.float32)
    r3, a3 = view_specific_edn(x3, w, b, num_classes=C)
    jax.block_until_ready((r3, a3))
    r3_ref, a3_ref = _reference(x3, w, b, C)
    assert jnp.allclose(a3, a3_ref, atol=1e-5, rtol=1e-5)
    assert jnp.allclose(r3, r3_ref, atol=1e-5, rtol=1e-5)

    print("KERNEL_OK")
</pallas_src>

<mosaic_0001>
module attributes {stable_mosaic.version = 11 : i64} {
  func.func @_edn_kernel(%arg0: i32, %arg1: memref<8x32xf32, #tpu.memory_space<vmem>>, %arg2: memref<32x8xf32, #tpu.memory_space<vmem>>, %arg3: memref<1x8xf32, #tpu.memory_space<vmem>>, %arg4: memref<8x8xf32, #tpu.memory_space<vmem>>, %arg5: memref<8x1xf32, #tpu.memory_space<vmem>>) attributes {dimension_semantics = [#tpu.dimension_semantics<parallel>], iteration_bounds = array<i64: 1>, scalar_prefetch = 0 : i64, scratch_operands = 0 : i64, tpu.core_type = #tpu.core_type<tc>, window_params = [{transform_indices = @transform_0, window_bounds = array<i64: 8, 32>}, {pipeline_mode = #tpu.pipeline_mode<synchronous>, transform_indices = @transform_1, window_bounds = array<i64: 32, 8>}, {pipeline_mode = #tpu.pipeline_mode<synchronous>, transform_indices = @transform_2, window_bounds = array<i64: 1, 8>}, {transform_indices = @transform_3, window_bounds = array<i64: 8, 8>}, {transform_indices = @transform_4, window_bounds = array<i64: 8, 1>}]} {
    %c0 = arith.constant 0 : index
    %c0_0 = arith.constant 0 : index
    %0 = vector.load %arg1[%c0, %c0_0] : memref<8x32xf32, #tpu.memory_space<vmem>>, vector<8x32xf32>
    %c0_1 = arith.constant 0 : index
    %c0_2 = arith.constant 0 : index
    %1 = vector.load %arg2[%c0_1, %c0_2] : memref<32x8xf32, #tpu.memory_space<vmem>>, vector<32x8xf32>
    %cst = arith.constant dense<0.000000e+00> : vector<8x8xf32>
    %2 = tpu.matmul %0, %1, %cst {dimension_numbers = #tpu.dot_dimension_numbers<[1], [0], [0], [1], [0, 0, 1, 1], [], []>} : vector<8x32xf32>, vector<32x8xf32>, vector<8x8xf32> -> vector<8x8xf32>
    %c0_3 = arith.constant 0 : index
    %c0_4 = arith.constant 0 : index
    %3 = vector.load %arg3[%c0_3, %c0_4] : memref<1x8xf32, #tpu.memory_space<vmem>>, vector<1x8xf32>
    %4 = vector.broadcast %3 : vector<1x8xf32> to vector<8x8xf32>
    %5 = arith.addf %2, %4 : vector<8x8xf32>
    %cst_5 = arith.constant 0.000000e+00 : f32
    %6 = vector.broadcast %cst_5 : f32 to vector<8x8xf32>
    %7 = arith.maximumf %5, %6 : vector<8x8xf32>
    %cst_6 = arith.constant 1.000000e+00 : f32
    %8 = vector.broadcast %cst_6 : f32 to vector<8x8xf32>
    %9 = arith.addf %7, %8 : vector<8x8xf32>
    %c0_7 = arith.constant 0 : index
    %c0_8 = arith.constant 0 : index
    %10 = vector.load %arg4[%c0_7, %c0_8] : memref<8x8xf32, #tpu.memory_space<vmem>>, vector<8x8xf32>
    tpu.vector_store %arg4[%c0_7, %c0_8], %9 {strides = array<i32>} : memref<8x8xf32, #tpu.memory_space<vmem>>, vector<8x8xf32>,
    %cst_9 = arith.constant dense<0.000000e+00> : vector<8xf32>
    %11 = vector.multi_reduction <add>, %9, %cst_9 [1] : vector<8x8xf32> to vector<8xf32>
    %12 = vector.shape_cast %11 : vector<8xf32> to vector<8x1xf32>
    %c0_10 = arith.constant 0 : index
    %c0_11 = arith.constant 0 : index
    %13 = vector.load %arg5[%c0_10, %c0_11] : memref<8x1xf32, #tpu.memory_space<vmem>>, vector<8x1xf32>
    tpu.vector_store %arg5[%c0_10, %c0_11], %12 {strides = array<i32>} : memref<8x1xf32, #tpu.memory_space<vmem>>, vector<8x1xf32>,
    return
  }
  func.func @transform_0(%arg0: i32) -> (i32, i32) {
    %c0_i32 = arith.constant 0 : i32
    %c0_i32_0 = arith.constant 0 : i32
    return %arg0, %c0_i32 : i32, i32
  }
  func.func @transform_1(%arg0: i32) -> (i32, i32) {
    %c0_i32 = arith.constant 0 : i32
    %c0_i32_0 = arith.constant 0 : i32
    %c0_i32_1 = arith.constant 0 : i32
    return %c0_i32, %c0_i32_0 : i32, i32
  }
  func.func @transform_2(%arg0: i32) -> (i32, i32) {
    %c0_i32 = arith.constant 0 : i32
    %c0_i32_0 = arith.constant 0 : i32
    %c0_i32_1 = arith.constant 0 : i32
    return %c0_i32, %c0_i32_0 : i32, i32
  }
  func.func @transform_3(%arg0: i32) -> (i32, i32) {
    %c0_i32 = arith.constant 0 : i32
    %c0_i32_0 = arith.constant 0 : i32
    return %arg0, %c0_i32 : i32, i32
  }
  func.func @transform_4(%arg0: i32) -> (i32, i32) {
    %c0_i32 = arith.constant 0 : i32
    %c0_i32_0 = arith.constant 0 : i32
    return %arg0, %c0_i32 : i32, i32
  }
}

</mosaic_0001>

<llo_original>
// kernel: view_specific_edn.1
$region0: #{view_specific_edn.1}
  #allocation0 [shape = 'u32[]', space=smem, size = 0x4, offset = 0x4, fixed_abs, tag = 'smem constant byte address 0x4 - core index']
  #allocation1 [shape = 'u32[144,128]{1,0:T(1,128)}', space=vmem, size = 0x12000, scoped, tag = 'internal scratch']
  %s0 = inlined_call_operand.vmem [shape: f32[8,32], index: 0, kind: input, shape index: {}]
  %s1 = inlined_call_operand.vmem [shape: f32[32,8], index: 1, kind: input, shape index: {}]
  %s2 = inlined_call_operand.vmem [shape: f32[1,8], index: 2, kind: input, shape index: {}]
  %s3 = inlined_call_operand.hbm [shape: f32[8,8], index: 3, kind: output, shape index: {0}]
  %s4 = inlined_call_operand.vmem [shape: f32[8,1], index: 4, kind: output, shape index: {1}]
  %5 = xla_tuple %s3, %s4
  %s6 = sld [smem:[#allocation0]]
  $region30: #{view_specific_edn.1} parent=0
    _
  %s8 = ssub.s32 1, %s6
  %s9 = scalar_select 0, %s8, %s6
  $region1: #{view_specific_edn.1} parent=0
    #allocation2 [shape = 'u8[4096]{0}', space=vmem, size = 0x1000, scoped, tag = 'output window, operand 0, single buffered']
    #allocation3 [shape = 's32[1]{0}', space=sflag, size = 0x4, scoped, tag = 'scoped memory for view_specific_edn.1']
    %10 = vsyncpa [#allocation3], 0
    // Predicated region
    $region2: #{view_specific_edn.1} parent=1 // pred_check
      _
    $region3: #{view_specific_edn.1} parent=1 // pred_check_branch
      %12 = sbr.rel (0) target = $region5
    $region4: #{view_specific_edn.1} parent=1 // pred_region
      _
    $region5: #{view_specific_edn.1} parent=1 // pred_fallthru
      _
    // Predicated region
    $region6: #{view_specific_edn.1} parent=1 // pred_check
      _
    $region7: #{view_specific_edn.1} parent=1 // pred_check_branch
      %14 = sbr.rel (0) target = $region9
    $region8: #{view_specific_edn.1} parent=1 // pred_region
      _
    $region9: #{view_specific_edn.1} parent=1 // pred_fallthru
      _
    // Predicated region
    $region10: #{view_specific_edn.1} parent=1 // pred_check
      _
    $region11: #{view_specific_edn.1} parent=1 // pred_check_branch
      %16 = sbr.rel (0) target = $region13
    $region12: #{view_specific_edn.1} parent=1 // pred_region
      _
    $region13: #{view_specific_edn.1} parent=1 // pred_fallthru
      _
    %v17 = vld [vmem:[%s0] sm:$0xff]
    %v18 = vld [vmem:[%s1] sm:$0xff]
    %v19 = vld [vmem:[%s1 + $0x8] sm:$0xff]
    %v20 = vld [vmem:[%s1 + $0x10] sm:$0xff]
    %v21 = vld [vmem:[%s1 + $0x18] sm:$0xff]
    %v22 = vld [vmem:[%s2] sm:$0x1]
    %v24 = vlaneseq
    %v25 = vshrl.u32 %v24, 7
    %v26 = vsub.s32 0, %v25
    %v27 = vrot.slane %v22, %v26
    %vm29 = vcmask 261120
    %v31 = vsel %vm29, %v17, 0
    %33 = vmatprep.subr.mxu0 0.0
    %34 = vmatpush1.msra.mxu0 %v18
    %35 = vmatprep.subr.mxu0 0.0
    %36 = vmatpush1.msra.mxu0 %v19
    %37 = vmatprep.subr.mxu0 0.0
    %38 = vmatpush1.msra.mxu0 %v20
    %39 = vmatprep.subr.mxu0 0.0
    %40 = vmatpush1.msra.mxu0 %v21
    %41 = vmatprep.subr.mxu0 0.0
    %42 = vmatpush1.msra.mxu0 0.0
    %43 = vmatprep.subr.mxu0 0.0
    %44 = vmatpush1.msra.mxu0 0.0
    %45 = vmatprep.subr.mxu0 0.0
    %46 = vmatpush1.msra.mxu0 0.0
    %47 = vmatprep.subr.mxu0 0.0
    %48 = vmatpush1.msra.mxu0 0.0
    %49 = vmatprep.subr.mxu0 0.0
    %50 = vmatpush1.msra.mxu0 0.0
    %51 = vmatprep.subr.mxu0 0.0
    %52 = vmatpush1.msra.mxu0 0.0
    %53 = vmatprep.subr.mxu0 0.0
    %54 = vmatpush1.msra.mxu0 0.0
    %55 = vmatprep.subr.mxu0 0.0
    %56 = vmatpush1.msra.mxu0 0.0
    %57 = vmatprep.subr.mxu0 0.0
    %58 = vmatpush1.msra.mxu0 0.0
    %59 = vmatprep.subr.mxu0 0.0
    %60 = vmatpush1.msra.mxu0 0.0
    %61 = vmatprep.subr.mxu0 0.0
    %62 = vmatpush1.msra.mxu0 0.0
    %63 = vmatprep.subr.mxu0 0.0
    %64 = vmatpush1.msra.mxu0 0.0
    %65 = vmatprep.subr.mxu0 0.0
    %66 = vmatpush1.msra.mxu0 0.0
    %67 = vmatprep.subr.mxu0 0.0
    %68 = vmatpush1.msra.mxu0 0.0
    %69 = vmatprep.subr.mxu0 0.0
    %70 = vmatpush1.msra.mxu0 0.0
    %71 = vmatprep.subr.mxu0 0.0
    %72 = vmatpush1.msra.mxu0 0.0
    %73 = vmatprep.subr.mxu0 0.0
    %74 = vmatpush1.msra.mxu0 0.0
    %75 = vmatprep.subr.mxu0 0.0
    %76 = vmatpush1.msra.mxu0 0.0
    %77 = vmatprep.subr.mxu0 0.0
    %78 = vmatpush1.msra.mxu0 0.0
    %79 = vmatprep.subr.mxu0 0.0
    %80 = vmatpush1.msra.mxu0 0.0
    %81 = vmatprep.subr.mxu0 0.0
    %82 = vmatpush1.msra.mxu0 0.0
    %83 = vmatprep.subr.mxu0 0.0
    %84 = vmatpush1.msra.mxu0 0.0
    %85 = vmatprep.subr.mxu0 0.0
    %86 = vmatpush1.msra.mxu0 0.0
    %87 = vmatprep.subr.mxu0 0.0
    %88 = vmatpush1.msra.mxu0 0.0
    %89 = vmatprep.subr.mxu0 0.0
    %90 = vmatpush1.msra.mxu0 0.0
    %91 = vmatprep.subr.mxu0 0.0
    %92 = vmatpush1.msra.mxu0 0.0
    %93 = vmatprep.subr.mxu0 0.0
    %94 = vmatpush1.msra.mxu0 0.0
    %95 = vmatprep.subr.mxu0 0.0
    %96 = vmatpush1.msra.mxu0 0.0
    %97 = vmatprep.mubr.f32.mxu0 0.0
    %98 = vmatmul.mubr.f32.gmra.mrb[0].mxu0 %v31
    %v99 = vpop.f32.mrb[0].mxu0
    %v100 = vadd.f32 %v27, %v99
    %v101 = vpop.f32.mrb[0].mxu0
    %102 = vdwg.mxu0
    %v103 = vmax.f32 %v100, 0.0
    %v104 = vadd.f32 %v103, 1.0
    %vm105 = vcmask 64512
    %106 = vst.msk [vmem:[#allocation2] sm:$0xff] %vm105, %v104
    %v107 = vsel %vm105, %v104, 0.0
    %108 = vadd.xlane.f32.xlu0 %v107
    %v109 = vpop.xlane.xlu0 %108
    %vm110 = vcmask 7168
    %111 = vst.msk [vmem:[%s4] sm:$0xff] %vm110, %v109
    // Predicated region
    $region14: #{view_specific_edn.1} parent=1 // pred_check
      _
    $region15: #{view_specific_edn.1} parent=1 // pred_check_branch
      %113 = sbr.rel (0) target = $region17
    $region16: #{view_specific_edn.1} parent=1 // pred_region
      %s115 = ssub.s32 128, 128
      %116 = vsyncadd [#allocation3], %s115
      %s118 = sshll.u32 [#allocation2], 4
      %s119 = int_to_ptr.vmem [resolvable:$true] %s118
      %121 = dma.vmem_to_hbm [thread:$0]  %s119, 128, %s3, [#allocation3]
    $region17: #{view_specific_edn.1} parent=1 // pred_fallthru
      _
    // Predicated region
    $region18: #{view_specific_edn.1} parent=1 // pred_check
      _
    $region19: #{view_specific_edn.1} parent=1 // pred_check_branch
      %123 = sbr.rel (0) target = $region21
    $region20: #{view_specific_edn.1} parent=1 // pred_region
      _
    $region21: #{view_specific_edn.1} parent=1 // pred_fallthru
      _
    // Predicated region
    $region22: #{view_specific_edn.1} parent=1 // pred_check
      _
    $region23: #{view_specific_edn.1} parent=1 // pred_check_branch
      %125 = sbr.rel (0) target = $region25
    $region24: #{view_specific_edn.1} parent=1 // pred_region
      %126 = dma.done [#allocation3], 128
    $region25: #{view_specific_edn.1} parent=1 // pred_fallthru
      _
    // Predicated region
    $region26: #{view_specific_edn.1} parent=1 // pred_check
      _
    $region27: #{view_specific_edn.1} parent=1 // pred_check_branch
      %128 = sbr.rel (0) target = $region29
    $region28: #{view_specific_edn.1} parent=1 // pred_region
      _
    $region29: #{view_specific_edn.1} parent=1 // pred_fallthru
      _
    %129 = vsyncpa [#allocation3], 1

</llo_original>
